<compile_context>
chip_gen: v7x
topology: tpu7x:2x2x1
jax: 0.10.0
libtpu: 0.0.40
codegen_flags: <defaults>
</compile_context>

<pallas_src>
import functools

import jax
import jax.numpy as jnp
from jax.experimental import pallas as pl
from jax.experimental.pallas import tpu as pltpu


def _round_up(n: int, m: int) -> int:
    return ((n + m - 1) // m) * m


def mlp_kernel(x_ref, w1_ref, b1_ref, w2_ref, b2_ref, o_ref):
    # fc1 on the MXU: bf16 inputs, f32 accumulation.
    h = jnp.dot(x_ref[...], w1_ref[...], preferred_element_type=jnp.float32)
    # Bias add + ReLU in f32 (VPU fast path on all generations).
    h = jnp.maximum(h + b1_ref[...], 0.0)
    # fc2: downcast the activation to bf16 only at the MXU input; accumulate f32.
    out = jnp.dot(h.astype(jnp.bfloat16), w2_ref[...],
                  preferred_element_type=jnp.float32)
    o_ref[...] = (out + b2_ref[...]).astype(o_ref.dtype)


@functools.partial(jax.jit, static_argnames=("block_b",))
def dnn_forward(x, w1, b1, w2, b2, *, block_b=128):
    """x: (B, D_in) f32; w1: (D_in, H); b1: (H,); w2: (H, D_out); b2: (D_out,).

    Weights are stored transposed relative to PyTorch's nn.Linear so the kernel
    computes plain x @ W + b on the MXU.
    """
    B, D_in = x.shape
    H = w1.shape[1]
    D_out = w2.shape[1]

    # Lane-dense padded shapes: feature dims -> multiples of 128; batch tile ->
    # multiple of 8 sublanes; batch -> multiple of the batch tile.
    dp_in = _round_up(D_in, 128)
    hp = _round_up(H, 128)
    dp_out = _round_up(D_out, 128)
    tb = min(block_b, _round_up(B, 8))
    bp = _round_up(B, tb)

    # Zero-pad (padded K rows/cols are zero, so the math is exact) and cast the
    # matmul operands to bf16. Biases stay f32 and broadcast as (1, F) rows.
    xp = jnp.zeros((bp, dp_in), jnp.bfloat16).at[:B, :D_in].set(
        x.astype(jnp.bfloat16))
    w1p = jnp.zeros((dp_in, hp), jnp.bfloat16).at[:D_in, :H].set(
        w1.astype(jnp.bfloat16))
    b1p = jnp.zeros((1, hp), jnp.float32).at[:, :H].set(b1.reshape(1, H))
    w2p = jnp.zeros((hp, dp_out), jnp.bfloat16).at[:H, :D_out].set(
        w2.astype(jnp.bfloat16))
    b2p = jnp.zeros((1, dp_out), jnp.float32).at[:, :D_out].set(
        b2.reshape(1, D_out))

    grid = (bp // tb,)
    flops = 2 * bp * (dp_in * hp + hp * dp_out)
    bytes_accessed = (xp.size * 2 + w1p.size * 2 + w2p.size * 2
                      + b1p.size * 4 + b2p.size * 4 + bp * dp_out * 4)

    out_padded = pl.pallas_call(
        mlp_kernel,
        out_shape=jax.ShapeDtypeStruct((bp, dp_out), jnp.float32),
        grid_spec=pltpu.PrefetchScalarGridSpec(
            num_scalar_prefetch=0,
            grid=grid,
            in_specs=[
                # x tile: streamed / double-buffered over the batch grid axis.
                pl.BlockSpec((tb, dp_in), lambda i: (i, 0)),
                # Weights & biases: same block for every i -> resident in VMEM,
                # DMA'd exactly once.
                pl.BlockSpec((dp_in, hp), lambda i: (0, 0)),
                pl.BlockSpec((1, hp), lambda i: (0, 0)),
                pl.BlockSpec((hp, dp_out), lambda i: (0, 0)),
                pl.BlockSpec((1, dp_out), lambda i: (0, 0)),
            ],
            out_specs=pl.BlockSpec((tb, dp_out), lambda i: (i, 0)),
        ),
        compiler_params=pltpu.CompilerParams(
            dimension_semantics=("parallel",),  # megacore sharding on v7x
        ),
        cost_estimate=pl.CostEstimate(
            flops=flops, transcendentals=0, bytes_accessed=bytes_accessed),
    )(xp, w1p, b1p, w2p, b2p)

    # Slice the padded lane-dense slab back to the module's true output shape.
    return out_padded[:B, :D_out]


def init_params(key, input_dim, hidden_dim, output_dim):
    """Deterministic synthetic parameters (nn.Linear shapes, stored transposed)."""
    k1, k2, k3, k4 = jax.random.split(key, 4)
    w1 = jax.random.normal(k1, (input_dim, hidden_dim), jnp.float32) * 0.1
    b1 = jax.random.normal(k2, (hidden_dim,), jnp.float32) * 0.1
    w2 = jax.random.normal(k3, (hidden_dim, output_dim), jnp.float32) * 0.1
    b2 = jax.random.normal(k4, (output_dim,), jnp.float32) * 0.1
    return w1, b1, w2, b2


if __name__ == "__main__":
    batch = 8
    input_dim = 16
    hidden_dim = 32
    output_dim = 4

    key = jax.random.PRNGKey(0)
    kx, kp = jax.random.split(key)
    x = jax.random.normal(kx, (batch, input_dim), jnp.float32)
    w1, b1, w2, b2 = init_params(kp, input_dim, hidden_dim, output_dim)

    out = dnn_forward(x, w1, b1, w2, b2)
    out = jax.block_until_ready(out)
    assert out.shape == (batch, output_dim)

    # Reference 1: same bf16-input / f32-accumulate recipe as the kernel.
    xb, w1b, w2b = (a.astype(jnp.bfloat16) for a in (x, w1, w2))
    h_ref = jnp.maximum(
        jnp.dot(xb, w1b, preferred_element_type=jnp.float32) + b1[None, :], 0.0)
    ref_bf16 = jnp.dot(h_ref.astype(jnp.bfloat16), w2b,
                       preferred_element_type=jnp.float32) + b2[None, :]
    assert jnp.allclose(out, ref_bf16, atol=1e-3, rtol=1e-3)

    # Reference 2: pure-f32 module semantics (loose tolerance for bf16 inputs).
    ref_f32 = jnp.maximum(x @ w1 + b1[None, :], 0.0) @ w2 + b2[None, :]
    assert jnp.allclose(out, ref_f32, atol=3e-2, rtol=3e-2)

    print("KERNEL_OK")
</pallas_src>

<mosaic_0001>
module attributes {stable_mosaic.version = 11 : i64} {
  func.func @mlp_kernel(%arg0: i32, %arg1: memref<8x128xbf16, #tpu.memory_space<vmem>>, %arg2: memref<128x128xbf16, #tpu.memory_space<vmem>>, %arg3: memref<1x128xf32, #tpu.memory_space<vmem>>, %arg4: memref<128x128xbf16, #tpu.memory_space<vmem>>, %arg5: memref<1x128xf32, #tpu.memory_space<vmem>>, %arg6: memref<8x128xf32, #tpu.memory_space<vmem>>) attributes {dimension_semantics = [#tpu.dimension_semantics<parallel>], iteration_bounds = array<i64: 1>, scalar_prefetch = 0 : i64, scratch_operands = 0 : i64, tpu.core_type = #tpu.core_type<tc>, window_params = [{transform_indices = @transform_0, window_bounds = array<i64: 8, 128>}, {pipeline_mode = #tpu.pipeline_mode<synchronous>, transform_indices = @transform_1, window_bounds = array<i64: 128, 128>}, {pipeline_mode = #tpu.pipeline_mode<synchronous>, transform_indices = @transform_2, window_bounds = array<i64: 1, 128>}, {pipeline_mode = #tpu.pipeline_mode<synchronous>, transform_indices = @transform_3, window_bounds = array<i64: 128, 128>}, {pipeline_mode = #tpu.pipeline_mode<synchronous>, transform_indices = @transform_4, window_bounds = array<i64: 1, 128>}, {transform_indices = @transform_5, window_bounds = array<i64: 8, 128>}]} {
    %c0 = arith.constant 0 : index
    %c0_0 = arith.constant 0 : index
    %0 = vector.load %arg1[%c0, %c0_0] : memref<8x128xbf16, #tpu.memory_space<vmem>>, vector<8x128xbf16>
    %c0_1 = arith.constant 0 : index
    %c0_2 = arith.constant 0 : index
    %1 = vector.load %arg2[%c0_1, %c0_2] : memref<128x128xbf16, #tpu.memory_space<vmem>>, vector<128x128xbf16>
    %cst = arith.constant dense<0.000000e+00> : vector<8x128xf32>
    %2 = tpu.matmul %0, %1, %cst {dimension_numbers = #tpu.dot_dimension_numbers<[1], [0], [0], [1], [0, 0, 1, 1], [], []>} : vector<8x128xbf16>, vector<128x128xbf16>, vector<8x128xf32> -> vector<8x128xf32>
    %c0_3 = arith.constant 0 : index
    %c0_4 = arith.constant 0 : index
    %3 = vector.load %arg3[%c0_3, %c0_4] : memref<1x128xf32, #tpu.memory_space<vmem>>, vector<1x128xf32>
    %4 = vector.broadcast %3 : vector<1x128xf32> to vector<8x128xf32>
    %5 = arith.addf %2, %4 : vector<8x128xf32>
    %cst_5 = arith.constant 0.000000e+00 : f32
    %6 = vector.broadcast %cst_5 : f32 to vector<8x128xf32>
    %7 = arith.maximumf %5, %6 : vector<8x128xf32>
    %8 = arith.truncf %7 : vector<8x128xf32> to vector<8x128xbf16>
    %c0_6 = arith.constant 0 : index
    %c0_7 = arith.constant 0 : index
    %9 = vector.load %arg4[%c0_6, %c0_7] : memref<128x128xbf16, #tpu.memory_space<vmem>>, vector<128x128xbf16>
    %cst_8 = arith.constant dense<0.000000e+00> : vector<8x128xf32>
    %10 = tpu.matmul %8, %9, %cst_8 {dimension_numbers = #tpu.dot_dimension_numbers<[1], [0], [0], [1], [0, 0, 1, 1], [], []>} : vector<8x128xbf16>, vector<128x128xbf16>, vector<8x128xf32> -> vector<8x128xf32>
    %c0_9 = arith.constant 0 : index
    %c0_10 = arith.constant 0 : index
    %11 = vector.load %arg5[%c0_9, %c0_10] : memref<1x128xf32, #tpu.memory_space<vmem>>, vector<1x128xf32>
    %12 = vector.broadcast %11 : vector<1x128xf32> to vector<8x128xf32>
    %13 = arith.addf %10, %12 : vector<8x128xf32>
    %c0_11 = arith.constant 0 : index
    %c0_12 = arith.constant 0 : index
    %14 = vector.load %arg6[%c0_11, %c0_12] : memref<8x128xf32, #tpu.memory_space<vmem>>, vector<8x128xf32>
    tpu.vector_store %arg6[%c0_11, %c0_12], %13 {strides = array<i32>} : memref<8x128xf32, #tpu.memory_space<vmem>>, vector<8x128xf32>,
    return
  }
  func.func @transform_0(%arg0: i32) -> (i32, i32) {
    %c0_i32 = arith.constant 0 : i32
    %c0_i32_0 = arith.constant 0 : i32
    return %arg0, %c0_i32 : i32, i32
  }
  func.func @transform_1(%arg0: i32) -> (i32, i32) {
    %c0_i32 = arith.constant 0 : i32
    %c0_i32_0 = arith.constant 0 : i32
    %c0_i32_1 = arith.constant 0 : i32
    return %c0_i32, %c0_i32_0 : i32, i32
  }
  func.func @transform_2(%arg0: i32) -> (i32, i32) {
    %c0_i32 = arith.constant 0 : i32
    %c0_i32_0 = arith.constant 0 : i32
    %c0_i32_1 = arith.constant 0 : i32
    return %c0_i32, %c0_i32_0 : i32, i32
  }
  func.func @transform_3(%arg0: i32) -> (i32, i32) {
    %c0_i32 = arith.constant 0 : i32
    %c0_i32_0 = arith.constant 0 : i32
    %c0_i32_1 = arith.constant 0 : i32
    return %c0_i32, %c0_i32_0 : i32, i32
  }
  func.func @transform_4(%arg0: i32) -> (i32, i32) {
    %c0_i32 = arith.constant 0 : i32
    %c0_i32_0 = arith.constant 0 : i32
    %c0_i32_1 = arith.constant 0 : i32
    return %c0_i32, %c0_i32_0 : i32, i32
  }
  func.func @transform_5(%arg0: i32) -> (i32, i32) {
    %c0_i32 = arith.constant 0 : i32
    %c0_i32_0 = arith.constant 0 : i32
    return %arg0, %c0_i32 : i32, i32
  }
}

</mosaic_0001>

<llo_original>
// kernel: dnn_forward.1
$region0: #{dnn_forward.1}
  #allocation0 [shape = 'u32[]', space=smem, size = 0x4, offset = 0x4, fixed_abs, tag = 'smem constant byte address 0x4 - core index']
  #allocation1 [shape = 'u32[144,128]{1,0:T(1,128)}', space=vmem, size = 0x12000, scoped, tag = 'internal scratch']
  %s0 = inlined_call_operand.vmem [shape: bf16[8,128], index: 0, kind: input, shape index: {}]
  %s1 = inlined_call_operand.vmem [shape: bf16[128,128], index: 1, kind: input, shape index: {}]
  %s2 = inlined_call_operand.vmem [shape: f32[1,128], index: 2, kind: input, shape index: {}]
  %s3 = inlined_call_operand.vmem [shape: bf16[128,128], index: 3, kind: input, shape index: {}]
  %s4 = inlined_call_operand.vmem [shape: f32[1,128], index: 4, kind: input, shape index: {}]
  %s5 = inlined_call_operand.vmem [shape: f32[8,128], index: 5, kind: output, shape index: {}]
  %s6 = sld [smem:[#allocation0]]
  $region30: #{dnn_forward.1} parent=0
    _
  %s8 = ssub.s32 1, %s6
  %s9 = scalar_select 0, %s8, %s6
  // Predicated region
  $region2: #{dnn_forward.1} parent=0 // pred_check
    _
  $region3: #{dnn_forward.1} parent=0 // pred_check_branch
    %11 = sbr.rel (0) target = $region5
  $region4: #{dnn_forward.1} parent=0 // pred_region
    _
  $region5: #{dnn_forward.1} parent=0 // pred_fallthru
    _
  // Predicated region
  $region6: #{dnn_forward.1} parent=0 // pred_check
    _
  $region7: #{dnn_forward.1} parent=0 // pred_check_branch
    %13 = sbr.rel (0) target = $region9
  $region8: #{dnn_forward.1} parent=0 // pred_region
    _
  $region9: #{dnn_forward.1} parent=0 // pred_fallthru
    _
  // Predicated region
  $region10: #{dnn_forward.1} parent=0 // pred_check
    _
  $region11: #{dnn_forward.1} parent=0 // pred_check_branch
    %15 = sbr.rel (0) target = $region13
  $region12: #{dnn_forward.1} parent=0 // pred_region
    _
  $region13: #{dnn_forward.1} parent=0 // pred_fallthru
    _
  // Predicated region
  $region14: #{dnn_forward.1} parent=0 // pred_check
    _
  $region15: #{dnn_forward.1} parent=0 // pred_check_branch
    %17 = sbr.rel (0) target = $region17
  $region16: #{dnn_forward.1} parent=0 // pred_region
    _
  $region17: #{dnn_forward.1} parent=0 // pred_fallthru
    _
  // Predicated region
  $region18: #{dnn_forward.1} parent=0 // pred_check
    _
  $region19: #{dnn_forward.1} parent=0 // pred_check_branch
    %19 = sbr.rel (0) target = $region21
  $region20: #{dnn_forward.1} parent=0 // pred_region
    _
  $region21: #{dnn_forward.1} parent=0 // pred_fallthru
    _
  %v21 = vld [vmem:[%s0] sm:$0xf]
  %v22 = vld [vmem:[%s1] sm:$0xf]
  %v23 = vld [vmem:[%s1 + $0x4] sm:$0xf]
  %v24 = vld [vmem:[%s1 + $0x8] sm:$0xf]
  %v25 = vld [vmem:[%s1 + $0xc] sm:$0xf]
  %v26 = vld [vmem:[%s1 + $0x10] sm:$0xf]
  %v27 = vld [vmem:[%s1 + $0x14] sm:$0xf]
  %v28 = vld [vmem:[%s1 + $0x18] sm:$0xf]
  %v29 = vld [vmem:[%s1 + $0x1c] sm:$0xf]
  %v30 = vld [vmem:[%s1 + $0x20] sm:$0xf]
  %v31 = vld [vmem:[%s1 + $0x24] sm:$0xf]
  %v32 = vld [vmem:[%s1 + $0x28] sm:$0xf]
  %v33 = vld [vmem:[%s1 + $0x2c] sm:$0xf]
  %v34 = vld [vmem:[%s1 + $0x30] sm:$0xf]
  %v35 = vld [vmem:[%s1 + $0x34] sm:$0xf]
  %v36 = vld [vmem:[%s1 + $0x38] sm:$0xf]
  %v37 = vld [vmem:[%s1 + $0x3c] sm:$0xf]
  %v38 = vld [vmem:[%s2] sm:$0x1]
  %v40 = vlaneseq
  %v41 = vshrl.u32 %v40, 7
  %v42 = vsub.s32 0, %v41
  %v43 = vrot.slane %v38, %v42
  %v61 = vunpack.c.l.b16 %v22
  %v62 = vunpack.c.l.b16 %v23
  %v63 = vunpack.c.l.b16 %v24
  %v64 = vunpack.c.l.b16 %v25
  %v65 = vunpack.c.l.b16 %v26
  %v66 = vunpack.c.l.b16 %v27
  %v67 = vunpack.c.l.b16 %v28
  %v68 = vunpack.c.l.b16 %v29
  %v69 = vunpack.c.l.b16 %v30
  %v70 = vunpack.c.l.b16 %v31
  %v71 = vunpack.c.l.b16 %v32
  %v72 = vunpack.c.l.b16 %v33
  %v73 = vunpack.c.l.b16 %v34
  %v74 = vunpack.c.l.b16 %v35
  %v75 = vunpack.c.l.b16 %v36
  %v76 = vunpack.c.l.b16 %v37
  %v77 = vpack.c.b16 %v62, %v61
  %v78 = vpack.c.b16 %v64, %v63
  %v79 = vpack.c.b16 %v66, %v65
  %v80 = vpack.c.b16 %v68, %v67
  %v81 = vpack.c.b16 %v70, %v69
  %v82 = vpack.c.b16 %v72, %v71
  %v83 = vpack.c.b16 %v74, %v73
  %v84 = vpack.c.b16 %v76, %v75
  %93 = vmatprep.subr.bf16.mxu0 0
  %94 = vmatpush1.bf16.msra.mxu0 %v77
  %95 = vmatprep.subr.bf16.mxu0 0
  %96 = vmatpush1.bf16.msra.mxu0 %v78
  %97 = vmatprep.subr.bf16.mxu0 0
  %98 = vmatpush1.bf16.msra.mxu0 %v79
  %99 = vmatprep.subr.bf16.mxu0 0
  %100 = vmatpush1.bf16.msra.mxu0 %v80
  %101 = vmatprep.subr.bf16.mxu0 0
  %102 = vmatpush1.bf16.msra.mxu0 %v81
  %103 = vmatprep.subr.bf16.mxu0 0
  %104 = vmatpush1.bf16.msra.mxu0 %v82
  %105 = vmatprep.subr.bf16.mxu0 0
  %106 = vmatpush1.bf16.msra.mxu0 %v83
  %107 = vmatprep.subr.bf16.mxu0 0
  %108 = vmatpush1.bf16.msra.mxu0 %v84
  %109 = vmatprep.subr.bf16.mxu0 0
  %110 = vmatpush1.bf16.msra.mxu0 0
  %111 = vmatprep.subr.bf16.mxu0 0
  %112 = vmatpush1.bf16.msra.mxu0 0
  %113 = vmatprep.subr.bf16.mxu0 0
  %114 = vmatpush1.bf16.msra.mxu0 0
  %115 = vmatprep.subr.bf16.mxu0 0
  %116 = vmatpush1.bf16.msra.mxu0 0
  %117 = vmatprep.subr.bf16.mxu0 0
  %118 = vmatpush1.bf16.msra.mxu0 0
  %119 = vmatprep.subr.bf16.mxu0 0
  %120 = vmatpush1.bf16.msra.mxu0 0
  %121 = vmatprep.subr.bf16.mxu0 0
  %122 = vmatpush1.bf16.msra.mxu0 0
  %123 = vmatprep.subr.bf16.mxu0 0
  %124 = vmatpush1.bf16.msra.mxu0 0
  %125 = vmatprep.mubr.bf16.mxu0 0
  %126 = vmatmul.mubr.bf16.gmra.mrb[0].mxu0 %v21
  %v127 = vpop.f32.mrb[0].mxu0
  %v128 = vadd.f32 %v43, %v127
  %v129 = vpop.f32.mrb[0].mxu0
  %v130 = vpop.f32.mrb[0].mxu0
  %v131 = vpop.f32.mrb[0].mxu0
  %132 = vdwg.mxu0
  %v133 = vmax.f32 %v128, 0.0
  %v134 = vpack.c.bf16 %v133, %v133
  %v135 = vld [vmem:[%s3] sm:$0xf]
  %v136 = vld [vmem:[%s3 + $0x4] sm:$0xf]
  %v137 = vld [vmem:[%s3 + $0x8] sm:$0xf]
  %v138 = vld [vmem:[%s3 + $0xc] sm:$0xf]
  %v139 = vld [vmem:[%s3 + $0x10] sm:$0xf]
  %v140 = vld [vmem:[%s3 + $0x14] sm:$0xf]
  %v141 = vld [vmem:[%s3 + $0x18] sm:$0xf]
  %v142 = vld [vmem:[%s3 + $0x1c] sm:$0xf]
  %v143 = vld [vmem:[%s3 + $0x20] sm:$0xf]
  %v144 = vld [vmem:[%s3 + $0x24] sm:$0xf]
  %v145 = vld [vmem:[%s3 + $0x28] sm:$0xf]
  %v146 = vld [vmem:[%s3 + $0x2c] sm:$0xf]
  %v147 = vld [vmem:[%s3 + $0x30] sm:$0xf]
  %v148 = vld [vmem:[%s3 + $0x34] sm:$0xf]
  %v149 = vld [vmem:[%s3 + $0x38] sm:$0xf]
  %v150 = vld [vmem:[%s3 + $0x3c] sm:$0xf]
  %v151 = vld [vmem:[%s4] sm:$0x1]
  %v153 = vlaneseq
  %v154 = vshrl.u32 %v153, 7
  %v155 = vsub.s32 0, %v154
  %v156 = vrot.slane %v151, %v155
  %v174 = vunpack.c.l.b16 %v135
  %v175 = vunpack.c.l.b16 %v136
  %v176 = vunpack.c.l.b16 %v137
  %v177 = vunpack.c.l.b16 %v138
  %v178 = vunpack.c.l.b16 %v139
  %v179 = vunpack.c.l.b16 %v140
  %v180 = vunpack.c.l.b16 %v141
  %v181 = vunpack.c.l.b16 %v142
  %v182 = vunpack.c.l.b16 %v143
  %v183 = vunpack.c.l.b16 %v144
  %v184 = vunpack.c.l.b16 %v145
  %v185 = vunpack.c.l.b16 %v146
  %v186 = vunpack.c.l.b16 %v147
  %v187 = vunpack.c.l.b16 %v148
  %v188 = vunpack.c.l.b16 %v149
  %v189 = vunpack.c.l.b16 %v150
  %v190 = vpack.c.b16 %v175, %v174
  %v191 = vpack.c.b16 %v177, %v176
  %v192 = vpack.c.b16 %v179, %v178
  %v193 = vpack.c.b16 %v181, %v180
  %v194 = vpack.c.b16 %v183, %v182
  %v195 = vpack.c.b16 %v185, %v184
  %v196 = vpack.c.b16 %v187, %v186
  %v197 = vpack.c.b16 %v189, %v188
  %206 = vmatprep.subr.bf16.mxu0 0
  %207 = vmatpush1.bf16.msra.mxu0 %v190
  %208 = vmatprep.subr.bf16.mxu0 0
  %209 = vmatpush1.bf16.msra.mxu0 %v191
  %210 = vmatprep.subr.bf16.mxu0 0
  %211 = vmatpush1.bf16.msra.mxu0 %v192
  %212 = vmatprep.subr.bf16.mxu0 0
  %213 = vmatpush1.bf16.msra.mxu0 %v193
  %214 = vmatprep.subr.bf16.mxu0 0
  %215 = vmatpush1.bf16.msra.mxu0 %v194
  %216 = vmatprep.subr.bf16.mxu0 0
  %217 = vmatpush1.bf16.msra.mxu0 %v195
  %218 = vmatprep.subr.bf16.mxu0 0
  %219 = vmatpush1.bf16.msra.mxu0 %v196
  %220 = vmatprep.subr.bf16.mxu0 0
  %221 = vmatpush1.bf16.msra.mxu0 %v197
  %222 = vmatprep.subr.bf16.mxu0 0
  %223 = vmatpush1.bf16.msra.mxu0 0
  %224 = vmatprep.subr.bf16.mxu0 0
  %225 = vmatpush1.bf16.msra.mxu0 0
  %226 = vmatprep.subr.bf16.mxu0 0
  %227 = vmatpush1.bf16.msra.mxu0 0
  %228 = vmatprep.subr.bf16.mxu0 0
  %229 = vmatpush1.bf16.msra.mxu0 0
  %230 = vmatprep.subr.bf16.mxu0 0
  %231 = vmatpush1.bf16.msra.mxu0 0
  %232 = vmatprep.subr.bf16.mxu0 0
  %233 = vmatpush1.bf16.msra.mxu0 0
  %234 = vmatprep.subr.bf16.mxu0 0
  %235 = vmatpush1.bf16.msra.mxu0 0
  %236 = vmatprep.subr.bf16.mxu0 0
  %237 = vmatpush1.bf16.msra.mxu0 0
  %238 = vmatprep.mubr.bf16.mxu0 0
  %239 = vmatmul.mubr.bf16.gmra.mrb[0].mxu0 %v134
  %v240 = vpop.f32.mrb[0].mxu0
  %v241 = vadd.f32 %v156, %v240
  %v242 = vpop.f32.mrb[0].mxu0
  %v243 = vpop.f32.mrb[0].mxu0
  %v244 = vpop.f32.mrb[0].mxu0
  %245 = vdwg.mxu0
  %246 = vst [vmem:[%s5] sm:$0xff] %v241
  // Predicated region
  $region22: #{dnn_forward.1} parent=0 // pred_check
    _
  $region23: #{dnn_forward.1} parent=0 // pred_check_branch
    %248 = sbr.rel (0) target = $region25
  $region24: #{dnn_forward.1} parent=0 // pred_region
    _
  $region25: #{dnn_forward.1} parent=0 // pred_fallthru
    _
  // Predicated region
  $region26: #{dnn_forward.1} parent=0 // pred_check
    _
  $region27: #{dnn_forward.1} parent=0 // pred_check_branch
    %250 = sbr.rel (0) target = $region29
  $region28: #{dnn_forward.1} parent=0 // pred_region
    _
  $region29: #{dnn_forward.1} parent=0 // pred_fallthru
    _

</llo_original>
